<compile_context>
chip_gen: v7x
topology: tpu7x:2x2x1
jax: 0.10.0
libtpu: 0.0.40
codegen_flags: <defaults>
</compile_context>

<pallas_src>
import jax
import jax.numpy as jnp
from jax.experimental import pallas as pl
from jax.experimental.pallas import tpu as pltpu


def conv1x1t_kernel(x_ref, w_ref, b_ref, o_ref):
    # x_ref: (N, C_in, HW)   VMEM (HW lane-dense)
    # w_ref: (C_out, C_in)   SMEM scalar weights
    # b_ref: (1, C_out, 1)   VMEM bias column
    # o_ref: (N, C_out, HW)  VMEM
    C_out, C_in = w_ref.shape
    x = x_ref[...]                                   # (N, C_in, HW), native dtype

    chans = []
    for o in range(C_out):                           # static unroll: C_out*C_in VPU FMAs
        acc = x[:, 0, :] * w_ref[o, 0]               # (N, HW)
        for c in range(1, C_in):
            acc = acc + x[:, c, :] * w_ref[o, c]
        chans.append(acc)

    out = jnp.stack(chans, axis=1) + b_ref[...]      # (N, C_out, HW), one bias broadcast
    o_ref[...] = out.astype(o_ref.dtype)             # single coalesced store


def conv_transpose_1x1(x_nchw, weight, bias):
    """ConvTranspose2d(C_in, C_out, kernel_size=1, stride=1, padding=0).

    x_nchw: (N, C_in, H, W); weight: (C_in, C_out, 1, 1); bias: (C_out,).
    """
    N, C_in, H, W = x_nchw.shape
    C_out = weight.shape[1]
    HW = H * W

    # Pure reshapes (no data movement): keep native NCHW so H*W is lane-dense.
    x3d = x_nchw.reshape(N, C_in, HW)
    w_t = weight.reshape(C_in, C_out).T.astype(x_nchw.dtype)   # (C_out, C_in), tiny
    b3d = bias.reshape(1, C_out, 1).astype(x_nchw.dtype)       # bias column for one add

    out3d = pl.pallas_call(
        conv1x1t_kernel,
        out_shape=jax.ShapeDtypeStruct((N, C_out, HW), x_nchw.dtype),
        in_specs=[
            pl.BlockSpec(memory_space=pltpu.MemorySpace.VMEM),  # x: whole array, one DMA
            pl.BlockSpec(memory_space=pltpu.MemorySpace.SMEM),  # weights: scalars
            pl.BlockSpec(memory_space=pltpu.MemorySpace.VMEM),  # bias column
        ],
        out_specs=pl.BlockSpec(memory_space=pltpu.MemorySpace.VMEM),
    )(x3d, w_t, b3d)

    return out3d.reshape(N, C_out, H, W)


if __name__ == "__main__":
    key = jax.random.PRNGKey(0)
    k_x, k_w, k_b = jax.random.split(key, 3)

    N, C_in, C_out, Hh, Ww = 2, 3, 5, 16, 16

    x = jax.random.normal(k_x, (N, C_in, Hh, Ww), dtype=jnp.float32)

    # Deterministic parameter init (mimics PyTorch uniform(-1/sqrt(fan), 1/sqrt(fan)))
    fan = C_in * 1 * 1
    bound = 1.0 / (fan ** 0.5)
    weight = jax.random.uniform(
        k_w, (C_in, C_out, 1, 1), dtype=jnp.float32, minval=-bound, maxval=bound
    )
    bias = jax.random.uniform(
        k_b, (C_out,), dtype=jnp.float32, minval=-bound, maxval=bound
    )

    out = conv_transpose_1x1(x, weight, bias)
    jax.block_until_ready(out)

    # Sanity check against a plain-JAX reference of the same math.
    ref = jnp.einsum("nchw,co->nohw", x, weight.reshape(C_in, C_out)) + bias[None, :, None, None]
    assert out.shape == (N, C_out, Hh, Ww)
    assert jnp.allclose(out, ref, atol=1e-5, rtol=1e-5)

    print("KERNEL_OK")
</pallas_src>

<mosaic_0001>
module attributes {stable_mosaic.version = 11 : i64} {
  func.func @conv1x1t_kernel(%arg0: memref<2x3x256xf32, #tpu.memory_space<vmem>>, %arg1: memref<5x3xf32, #tpu.memory_space<smem>>, %arg2: memref<1x5x1xf32, #tpu.memory_space<vmem>>, %arg3: memref<2x5x256xf32, #tpu.memory_space<vmem>>) attributes {dimension_semantics = [], scalar_prefetch = 0 : i64, scratch_operands = 0 : i64, tpu.core_type = #tpu.core_type<tc>} {
    %c0 = arith.constant 0 : index
    %c0_0 = arith.constant 0 : index
    %c0_1 = arith.constant 0 : index
    %0 = vector.load %arg0[%c0, %c0_0, %c0_1] : memref<2x3x256xf32, #tpu.memory_space<vmem>>, vector<2x3x256xf32>
    %1 = vector.extract_strided_slice %0 {offsets = [0, 0, 0], sizes = [2, 1, 256], strides = [1, 1, 1]} : vector<2x3x256xf32> to vector<2x1x256xf32>
    %2 = vector.shape_cast %1 : vector<2x1x256xf32> to vector<2x256xf32>
    %c0_2 = arith.constant 0 : index
    %c0_3 = arith.constant 0 : index
    %3 = memref.load %arg1[%c0_2, %c0_3] : memref<5x3xf32, #tpu.memory_space<smem>>
    %4 = vector.broadcast %3 : f32 to vector<2x256xf32>
    %5 = arith.mulf %2, %4 : vector<2x256xf32>
    %6 = vector.extract_strided_slice %0 {offsets = [0, 1, 0], sizes = [2, 1, 256], strides = [1, 1, 1]} : vector<2x3x256xf32> to vector<2x1x256xf32>
    %7 = vector.shape_cast %6 : vector<2x1x256xf32> to vector<2x256xf32>
    %c0_4 = arith.constant 0 : index
    %c1 = arith.constant 1 : index
    %8 = memref.load %arg1[%c0_4, %c1] : memref<5x3xf32, #tpu.memory_space<smem>>
    %9 = vector.broadcast %8 : f32 to vector<2x256xf32>
    %10 = arith.mulf %7, %9 : vector<2x256xf32>
    %11 = arith.addf %5, %10 : vector<2x256xf32>
    %12 = vector.extract_strided_slice %0 {offsets = [0, 2, 0], sizes = [2, 1, 256], strides = [1, 1, 1]} : vector<2x3x256xf32> to vector<2x1x256xf32>
    %13 = vector.shape_cast %12 : vector<2x1x256xf32> to vector<2x256xf32>
    %c0_5 = arith.constant 0 : index
    %c2 = arith.constant 2 : index
    %14 = memref.load %arg1[%c0_5, %c2] : memref<5x3xf32, #tpu.memory_space<smem>>
    %15 = vector.broadcast %14 : f32 to vector<2x256xf32>
    %16 = arith.mulf %13, %15 : vector<2x256xf32>
    %17 = arith.addf %11, %16 : vector<2x256xf32>
    %18 = vector.extract_strided_slice %0 {offsets = [0, 0, 0], sizes = [2, 1, 256], strides = [1, 1, 1]} : vector<2x3x256xf32> to vector<2x1x256xf32>
    %19 = vector.shape_cast %18 : vector<2x1x256xf32> to vector<2x256xf32>
    %c1_6 = arith.constant 1 : index
    %c0_7 = arith.constant 0 : index
    %20 = memref.load %arg1[%c1_6, %c0_7] : memref<5x3xf32, #tpu.memory_space<smem>>
    %21 = vector.broadcast %20 : f32 to vector<2x256xf32>
    %22 = arith.mulf %19, %21 : vector<2x256xf32>
    %23 = vector.extract_strided_slice %0 {offsets = [0, 1, 0], sizes = [2, 1, 256], strides = [1, 1, 1]} : vector<2x3x256xf32> to vector<2x1x256xf32>
    %24 = vector.shape_cast %23 : vector<2x1x256xf32> to vector<2x256xf32>
    %c1_8 = arith.constant 1 : index
    %c1_9 = arith.constant 1 : index
    %25 = memref.load %arg1[%c1_8, %c1_9] : memref<5x3xf32, #tpu.memory_space<smem>>
    %26 = vector.broadcast %25 : f32 to vector<2x256xf32>
    %27 = arith.mulf %24, %26 : vector<2x256xf32>
    %28 = arith.addf %22, %27 : vector<2x256xf32>
    %29 = vector.extract_strided_slice %0 {offsets = [0, 2, 0], sizes = [2, 1, 256], strides = [1, 1, 1]} : vector<2x3x256xf32> to vector<2x1x256xf32>
    %30 = vector.shape_cast %29 : vector<2x1x256xf32> to vector<2x256xf32>
    %c1_10 = arith.constant 1 : index
    %c2_11 = arith.constant 2 : index
    %31 = memref.load %arg1[%c1_10, %c2_11] : memref<5x3xf32, #tpu.memory_space<smem>>
    %32 = vector.broadcast %31 : f32 to vector<2x256xf32>
    %33 = arith.mulf %30, %32 : vector<2x256xf32>
    %34 = arith.addf %28, %33 : vector<2x256xf32>
    %35 = vector.extract_strided_slice %0 {offsets = [0, 0, 0], sizes = [2, 1, 256], strides = [1, 1, 1]} : vector<2x3x256xf32> to vector<2x1x256xf32>
    %36 = vector.shape_cast %35 : vector<2x1x256xf32> to vector<2x256xf32>
    %c2_12 = arith.constant 2 : index
    %c0_13 = arith.constant 0 : index
    %37 = memref.load %arg1[%c2_12, %c0_13] : memref<5x3xf32, #tpu.memory_space<smem>>
    %38 = vector.broadcast %37 : f32 to vector<2x256xf32>
    %39 = arith.mulf %36, %38 : vector<2x256xf32>
    %40 = vector.extract_strided_slice %0 {offsets = [0, 1, 0], sizes = [2, 1, 256], strides = [1, 1, 1]} : vector<2x3x256xf32> to vector<2x1x256xf32>
    %41 = vector.shape_cast %40 : vector<2x1x256xf32> to vector<2x256xf32>
    %c2_14 = arith.constant 2 : index
    %c1_15 = arith.constant 1 : index
    %42 = memref.load %arg1[%c2_14, %c1_15] : memref<5x3xf32, #tpu.memory_space<smem>>
    %43 = vector.broadcast %42 : f32 to vector<2x256xf32>
    %44 = arith.mulf %41, %43 : vector<2x256xf32>
    %45 = arith.addf %39, %44 : vector<2x256xf32>
    %46 = vector.extract_strided_slice %0 {offsets = [0, 2, 0], sizes = [2, 1, 256], strides = [1, 1, 1]} : vector<2x3x256xf32> to vector<2x1x256xf32>
    %47 = vector.shape_cast %46 : vector<2x1x256xf32> to vector<2x256xf32>
    %c2_16 = arith.constant 2 : index
    %c2_17 = arith.constant 2 : index
    %48 = memref.load %arg1[%c2_16, %c2_17] : memref<5x3xf32, #tpu.memory_space<smem>>
    %49 = vector.broadcast %48 : f32 to vector<2x256xf32>
    %50 = arith.mulf %47, %49 : vector<2x256xf32>
    %51 = arith.addf %45, %50 : vector<2x256xf32>
    %52 = vector.extract_strided_slice %0 {offsets = [0, 0, 0], sizes = [2, 1, 256], strides = [1, 1, 1]} : vector<2x3x256xf32> to vector<2x1x256xf32>
    %53 = vector.shape_cast %52 : vector<2x1x256xf32> to vector<2x256xf32>
    %c3 = arith.constant 3 : index
    %c0_18 = arith.constant 0 : index
    %54 = memref.load %arg1[%c3, %c0_18] : memref<5x3xf32, #tpu.memory_space<smem>>
    %55 = vector.broadcast %54 : f32 to vector<2x256xf32>
    %56 = arith.mulf %53, %55 : vector<2x256xf32>
    %57 = vector.extract_strided_slice %0 {offsets = [0, 1, 0], sizes = [2, 1, 256], strides = [1, 1, 1]} : vector<2x3x256xf32> to vector<2x1x256xf32>
    %58 = vector.shape_cast %57 : vector<2x1x256xf32> to vector<2x256xf32>
    %c3_19 = arith.constant 3 : index
    %c1_20 = arith.constant 1 : index
    %59 = memref.load %arg1[%c3_19, %c1_20] : memref<5x3xf32, #tpu.memory_space<smem>>
    %60 = vector.broadcast %59 : f32 to vector<2x256xf32>
    %61 = arith.mulf %58, %60 : vector<2x256xf32>
    %62 = arith.addf %56, %61 : vector<2x256xf32>
    %63 = vector.extract_strided_slice %0 {offsets = [0, 2, 0], sizes = [2, 1, 256], strides = [1, 1, 1]} : vector<2x3x256xf32> to vector<2x1x256xf32>
    %64 = vector.shape_cast %63 : vector<2x1x256xf32> to vector<2x256xf32>
    %c3_21 = arith.constant 3 : index
    %c2_22 = arith.constant 2 : index
    %65 = memref.load %arg1[%c3_21, %c2_22] : memref<5x3xf32, #tpu.memory_space<smem>>
    %66 = vector.broadcast %65 : f32 to vector<2x256xf32>
    %67 = arith.mulf %64, %66 : vector<2x256xf32>
    %68 = arith.addf %62, %67 : vector<2x256xf32>
    %69 = vector.extract_strided_slice %0 {offsets = [0, 0, 0], sizes = [2, 1, 256], strides = [1, 1, 1]} : vector<2x3x256xf32> to vector<2x1x256xf32>
    %70 = vector.shape_cast %69 : vector<2x1x256xf32> to vector<2x256xf32>
    %c4 = arith.constant 4 : index
    %c0_23 = arith.constant 0 : index
    %71 = memref.load %arg1[%c4, %c0_23] : memref<5x3xf32, #tpu.memory_space<smem>>
    %72 = vector.broadcast %71 : f32 to vector<2x256xf32>
    %73 = arith.mulf %70, %72 : vector<2x256xf32>
    %74 = vector.extract_strided_slice %0 {offsets = [0, 1, 0], sizes = [2, 1, 256], strides = [1, 1, 1]} : vector<2x3x256xf32> to vector<2x1x256xf32>
    %75 = vector.shape_cast %74 : vector<2x1x256xf32> to vector<2x256xf32>
    %c4_24 = arith.constant 4 : index
    %c1_25 = arith.constant 1 : index
    %76 = memref.load %arg1[%c4_24, %c1_25] : memref<5x3xf32, #tpu.memory_space<smem>>
    %77 = vector.broadcast %76 : f32 to vector<2x256xf32>
    %78 = arith.mulf %75, %77 : vector<2x256xf32>
    %79 = arith.addf %73, %78 : vector<2x256xf32>
    %80 = vector.extract_strided_slice %0 {offsets = [0, 2, 0], sizes = [2, 1, 256], strides = [1, 1, 1]} : vector<2x3x256xf32> to vector<2x1x256xf32>
    %81 = vector.shape_cast %80 : vector<2x1x256xf32> to vector<2x256xf32>
    %c4_26 = arith.constant 4 : index
    %c2_27 = arith.constant 2 : index
    %82 = memref.load %arg1[%c4_26, %c2_27] : memref<5x3xf32, #tpu.memory_space<smem>>
    %83 = vector.broadcast %82 : f32 to vector<2x256xf32>
    %84 = arith.mulf %81, %83 : vector<2x256xf32>
    %85 = arith.addf %79, %84 : vector<2x256xf32>
    %86 = vector.shape_cast %17 : vector<2x256xf32> to vector<2x1x256xf32>
    %87 = vector.shape_cast %34 : vector<2x256xf32> to vector<2x1x256xf32>
    %88 = vector.shape_cast %51 : vector<2x256xf32> to vector<2x1x256xf32>
    %89 = vector.shape_cast %68 : vector<2x256xf32> to vector<2x1x256xf32>
    %90 = vector.shape_cast %85 : vector<2x256xf32> to vector<2x1x256xf32>
    %91 = tpu.concatenate %86, %87, %88, %89, %90 in 1 : vector<2x1x256xf32>, vector<2x1x256xf32>, vector<2x1x256xf32>, vector<2x1x256xf32>, vector<2x1x256xf32> -> vector<2x5x256xf32>
    %c0_28 = arith.constant 0 : index
    %c0_29 = arith.constant 0 : index
    %c0_30 = arith.constant 0 : index
    %92 = vector.load %arg2[%c0_28, %c0_29, %c0_30] : memref<1x5x1xf32, #tpu.memory_space<vmem>>, vector<1x5x1xf32>
    %93 = vector.broadcast %92 : vector<1x5x1xf32> to vector<2x5x256xf32>
    %94 = arith.addf %91, %93 : vector<2x5x256xf32>
    %c0_31 = arith.constant 0 : index
    %c0_32 = arith.constant 0 : index
    %c0_33 = arith.constant 0 : index
    %95 = vector.load %arg3[%c0_31, %c0_32, %c0_33] : memref<2x5x256xf32, #tpu.memory_space<vmem>>, vector<2x5x256xf32>
    tpu.vector_store %arg3[%c0_31, %c0_32, %c0_33], %94 {strides = array<i32>} : memref<2x5x256xf32, #tpu.memory_space<vmem>>, vector<2x5x256xf32>,
    return
  }
}

</mosaic_0001>

<llo_original>
// kernel: tpu_custom_call.1
$region0: #{tpu_custom_call.1}
  #allocation0 [shape = 'u32[]', space=smem, size = 0x4, offset = 0x4, fixed_abs, tag = 'smem constant byte address 0x4 - core index']
  #allocation1 [shape = 'u32[144,128]{1,0:T(1,128)}', space=vmem, size = 0x12000, scoped, tag = 'internal scratch']
  %s0 = inlined_call_operand.vmem [shape: f32[2,3,256], index: 0, kind: input, shape index: {}]
  %s1 = inlined_call_operand.vmem [shape: f32[5,3], index: 1, kind: input, shape index: {}]
  %s2 = inlined_call_operand.vmem [shape: f32[1,5,1], index: 2, kind: input, shape index: {}]
  %s3 = inlined_call_operand.vmem [shape: f32[2,5,256], index: 3, kind: output, shape index: {}]
  %s4 = sld [smem:[#allocation0]]
  $region26: #{tpu_custom_call.1} parent=0
    _
  %s6 = ssub.s32 1, %s4
  %s7 = scalar_select 0, %s6, %s4
  $region1: #{tpu_custom_call.1} parent=0
    #allocation2 [shape = 'u8[4096]{0}', space=smem, size = 0x1000, scoped, tag = 'input window, operand 1, single buffered']
    #allocation3 [shape = 's32[1]{0}', space=sflag, size = 0x4, scoped, tag = 'scoped memory for tpu_custom_call.1']
    %8 = vsyncpa [#allocation3], 0
    // Predicated region
    $region2: #{tpu_custom_call.1} parent=1 // pred_check
      _
    $region3: #{tpu_custom_call.1} parent=1 // pred_check_branch
      %10 = sbr.rel (0) target = $region5
    $region4: #{tpu_custom_call.1} parent=1 // pred_region
      _
    $region5: #{tpu_custom_call.1} parent=1 // pred_fallthru
      _
    // Predicated region
    $region6: #{tpu_custom_call.1} parent=1 // pred_check
      _
    $region7: #{tpu_custom_call.1} parent=1 // pred_check_branch
      %12 = sbr.rel (0) target = $region9
    $region8: #{tpu_custom_call.1} parent=1 // pred_region
      %s14 = ssub.s32 128, 128
      %15 = vsyncadd [#allocation3], %s14
      %s17 = sshll.u32 %s1, 4
      %s18 = int_to_ptr.vmem [resolvable:$true] %s17
      %20 = dma.vmem_to_smem %s18, 128, [#allocation2], [#allocation3]
    $region9: #{tpu_custom_call.1} parent=1 // pred_fallthru
      _
    // Predicated region
    $region10: #{tpu_custom_call.1} parent=1 // pred_check
      _
    $region11: #{tpu_custom_call.1} parent=1 // pred_check_branch
      %22 = sbr.rel (0) target = $region13
    $region12: #{tpu_custom_call.1} parent=1 // pred_region
      _
    $region13: #{tpu_custom_call.1} parent=1 // pred_fallthru
      _
    // Predicated region
    $region14: #{tpu_custom_call.1} parent=1 // pred_check
      _
    $region15: #{tpu_custom_call.1} parent=1 // pred_check_branch
      %24 = sbr.rel (0) target = $region17
    $region16: #{tpu_custom_call.1} parent=1 // pred_region
      %25 = dma.done [#allocation3], 128
    $region17: #{tpu_custom_call.1} parent=1 // pred_fallthru
      _
    %26 = sfence
    %v27 = vld [vmem:[%s0] sm:$0x77]
    %v28 = vld [vmem:[%s0 + $0x8] sm:$0x77]
    %s29 = sld [smem:[#allocation2]]
    %v30 = vstv %s29
    %v31 = vmul.f32 %v27, %v30
    %v32 = vmul.f32 %v28, %v30
    %s33 = sld [smem:[#allocation2 + $0x1]]
    %v34 = vstv %s33
    %v35 = vmul.f32 %v27, %v34
    %v36 = vmul.f32 %v28, %v34
    %v39 = vrot.slane %v35, 5
    %v40 = vrot.slane %v39, 4
    %v41 = vrot.slane %v36, 5
    %v42 = vrot.slane %v41, 4
    %v45 = vadd.f32 %v31, %v40
    %v46 = vadd.f32 %v32, %v42
    %s47 = sld [smem:[#allocation2 + $0x2]]
    %v48 = vstv %s47
    %v49 = vmul.f32 %v27, %v48
    %v50 = vmul.f32 %v28, %v48
    %v53 = vrot.slane %v49, 6
    %v54 = vrot.slane %v53, 4
    %v55 = vrot.slane %v50, 6
    %v56 = vrot.slane %v55, 4
    %v59 = vadd.f32 %v45, %v54
    %v60 = vadd.f32 %v46, %v56
    %s61 = sld [smem:[#allocation2 + $0x80]]
    %v62 = vstv %s61
    %v63 = vmul.f32 %v27, %v62
    %v64 = vmul.f32 %v28, %v62
    %s65 = sld [smem:[#allocation2 + $0x81]]
    %v66 = vstv %s65
    %v67 = vmul.f32 %v27, %v66
    %v68 = vmul.f32 %v28, %v66
    %v71 = vrot.slane %v67, 5
    %v72 = vrot.slane %v71, 4
    %v73 = vrot.slane %v68, 5
    %v74 = vrot.slane %v73, 4
    %v77 = vadd.f32 %v63, %v72
    %v78 = vadd.f32 %v64, %v74
    %s79 = sld [smem:[#allocation2 + $0x82]]
    %v80 = vstv %s79
    %v81 = vmul.f32 %v27, %v80
    %v82 = vmul.f32 %v28, %v80
    %v85 = vrot.slane %v81, 6
    %v86 = vrot.slane %v85, 4
    %v87 = vrot.slane %v82, 6
    %v88 = vrot.slane %v87, 4
    %v91 = vadd.f32 %v77, %v86
    %v92 = vadd.f32 %v78, %v88
    %s93 = sld [smem:[#allocation2 + $0x100]]
    %v94 = vstv %s93
    %v95 = vmul.f32 %v27, %v94
    %v96 = vmul.f32 %v28, %v94
    %s97 = sld [smem:[#allocation2 + $0x101]]
    %v98 = vstv %s97
    %v99 = vmul.f32 %v27, %v98
    %v100 = vmul.f32 %v28, %v98
    %v103 = vrot.slane %v99, 5
    %v104 = vrot.slane %v103, 4
    %v105 = vrot.slane %v100, 5
    %v106 = vrot.slane %v105, 4
    %v109 = vadd.f32 %v95, %v104
    %v110 = vadd.f32 %v96, %v106
    %s111 = sld [smem:[#allocation2 + $0x102]]
    %v112 = vstv %s111
    %v113 = vmul.f32 %v27, %v112
    %v114 = vmul.f32 %v28, %v112
    %v117 = vrot.slane %v113, 6
    %v118 = vrot.slane %v117, 4
    %v119 = vrot.slane %v114, 6
    %v120 = vrot.slane %v119, 4
    %v123 = vadd.f32 %v109, %v118
    %v124 = vadd.f32 %v110, %v120
    %s125 = sld [smem:[#allocation2 + $0x180]]
    %v126 = vstv %s125
    %v127 = vmul.f32 %v27, %v126
    %v128 = vmul.f32 %v28, %v126
    %s129 = sld [smem:[#allocation2 + $0x181]]
    %v130 = vstv %s129
    %v131 = vmul.f32 %v27, %v130
    %v132 = vmul.f32 %v28, %v130
    %v135 = vrot.slane %v131, 5
    %v136 = vrot.slane %v135, 4
    %v137 = vrot.slane %v132, 5
    %v138 = vrot.slane %v137, 4
    %v141 = vadd.f32 %v127, %v136
    %v142 = vadd.f32 %v128, %v138
    %s143 = sld [smem:[#allocation2 + $0x182]]
    %v144 = vstv %s143
    %v145 = vmul.f32 %v27, %v144
    %v146 = vmul.f32 %v28, %v144
    %v149 = vrot.slane %v145, 6
    %v150 = vrot.slane %v149, 4
    %v151 = vrot.slane %v146, 6
    %v152 = vrot.slane %v151, 4
    %v155 = vadd.f32 %v141, %v150
    %v156 = vadd.f32 %v142, %v152
    %s157 = sld [smem:[#allocation2 + $0x200]]
    %v158 = vstv %s157
    %v159 = vmul.f32 %v27, %v158
    %v160 = vmul.f32 %v28, %v158
    %s161 = sld [smem:[#allocation2 + $0x201]]
    %v162 = vstv %s161
    %v163 = vmul.f32 %v27, %v162
    %v164 = vmul.f32 %v28, %v162
    %v167 = vrot.slane %v163, 5
    %v168 = vrot.slane %v167, 4
    %v169 = vrot.slane %v164, 5
    %v170 = vrot.slane %v169, 4
    %v173 = vadd.f32 %v159, %v168
    %v174 = vadd.f32 %v160, %v170
    %s175 = sld [smem:[#allocation2 + $0x202]]
    %v176 = vstv %s175
    %v177 = vmul.f32 %v27, %v176
    %v178 = vmul.f32 %v28, %v176
    %v181 = vrot.slane %v177, 6
    %v182 = vrot.slane %v181, 4
    %v183 = vrot.slane %v178, 6
    %v184 = vrot.slane %v183, 4
    %v187 = vadd.f32 %v173, %v182
    %v188 = vadd.f32 %v174, %v184
    %v191 = vlaneseq
    %v192 = vshrl.u32 %v191, 7
    %v193 = vsub.s32 0, %v192
    %v194 = vrot.slane %v59, %v193
    %v195 = vlaneseq
    %v196 = vshrl.u32 %v195, 7
    %v197 = vsub.s32 4, %v196
    %v198 = vrot.slane %v59, %v197
    %v199 = vlaneseq
    %v200 = vshrl.u32 %v199, 7
    %v201 = vsub.s32 0, %v200
    %v202 = vrot.slane %v60, %v201
    %v203 = vlaneseq
    %v204 = vshrl.u32 %v203, 7
    %v205 = vsub.s32 4, %v204
    %v206 = vrot.slane %v60, %v205
    %v213 = vlaneseq
    %v214 = vshrl.u32 %v213, 7
    %v215 = vsub.s32 0, %v214
    %v216 = vrot.slane %v91, %v215
    %v217 = vlaneseq
    %v218 = vshrl.u32 %v217, 7
    %v219 = vsub.s32 4, %v218
    %v220 = vrot.slane %v91, %v219
    %v221 = vlaneseq
    %v222 = vshrl.u32 %v221, 7
    %v223 = vsub.s32 0, %v222
    %v224 = vrot.slane %v92, %v223
    %v225 = vlaneseq
    %v226 = vshrl.u32 %v225, 7
    %v227 = vsub.s32 4, %v226
    %v228 = vrot.slane %v92, %v227
    %v235 = vlaneseq
    %v236 = vshrl.u32 %v235, 7
    %v237 = vsub.s32 0, %v236
    %v238 = vrot.slane %v123, %v237
    %v239 = vlaneseq
    %v240 = vshrl.u32 %v239, 7
    %v241 = vsub.s32 4, %v240
    %v242 = vrot.slane %v123, %v241
    %v243 = vlaneseq
    %v244 = vshrl.u32 %v243, 7
    %v245 = vsub.s32 0, %v244
    %v246 = vrot.slane %v124, %v245
    %v247 = vlaneseq
    %v248 = vshrl.u32 %v247, 7
    %v249 = vsub.s32 4, %v248
    %v250 = vrot.slane %v124, %v249
    %v257 = vlaneseq
    %v258 = vshrl.u32 %v257, 7
    %v259 = vsub.s32 0, %v258
    %v260 = vrot.slane %v155, %v259
    %v261 = vlaneseq
    %v262 = vshrl.u32 %v261, 7
    %v263 = vsub.s32 4, %v262
    %v264 = vrot.slane %v155, %v263
    %v265 = vlaneseq
    %v266 = vshrl.u32 %v265, 7
    %v267 = vsub.s32 0, %v266
    %v268 = vrot.slane %v156, %v267
    %v269 = vlaneseq
    %v270 = vshrl.u32 %v269, 7
    %v271 = vsub.s32 4, %v270
    %v272 = vrot.slane %v156, %v271
    %v279 = vlaneseq
    %v280 = vshrl.u32 %v279, 7
    %v281 = vsub.s32 0, %v280
    %v282 = vrot.slane %v187, %v281
    %v283 = vlaneseq
    %v284 = vshrl.u32 %v283, 7
    %v285 = vsub.s32 4, %v284
    %v286 = vrot.slane %v187, %v285
    %v287 = vlaneseq
    %v288 = vshrl.u32 %v287, 7
    %v289 = vsub.s32 0, %v288
    %v290 = vrot.slane %v188, %v289
    %v291 = vlaneseq
    %v292 = vshrl.u32 %v291, 7
    %v293 = vsub.s32 4, %v292
    %v294 = vrot.slane %v188, %v293
    %vm299 = vcmask 1040384
    %v300 = vsel %vm299, %v194, %v216
    %v301 = vsel %vm299, %v198, %v220
    %v302 = vsel %vm299, %v202, %v224
    %v303 = vsel %vm299, %v206, %v228
    %vm304 = vcmask 1041408
    %v305 = vsel %vm304, %v300, %v238
    %v306 = vsel %vm304, %v301, %v242
    %v307 = vsel %vm304, %v302, %v246
    %v308 = vsel %vm304, %v303, %v250
    %vm309 = vcmask 1042432
    %v310 = vsel %vm309, %v305, %v260
    %v311 = vsel %vm309, %v306, %v264
    %v312 = vsel %vm309, %v307, %v268
    %v313 = vsel %vm309, %v308, %v272
    %vm314 = vcmask 1043456
    %v315 = vsel %vm314, %v310, %v282
    %v316 = vsel %vm314, %v311, %v286
    %v317 = vsel %vm314, %v312, %v290
    %v318 = vsel %vm314, %v313, %v294
    %v319 = vld [vmem:[%s2] sm:$0x1f]
    %321 = vset.pattern.permute.xlu0 0
    %322 = vperm.xlu0 %321, %v319
    %v323 = vpop.permute.xlu0 %322
    %v325 = vadd.f32 %v315, %v323
    %v326 = vadd.f32 %v316, %v323
    %v327 = vadd.f32 %v317, %v323
    %v328 = vadd.f32 %v318, %v323
    %329 = vst [vmem:[%s3] sm:$0x1f] %v325
    %330 = vst [vmem:[%s3 + $0x8] sm:$0x1f] %v326
    %331 = vst [vmem:[%s3 + $0x10] sm:$0x1f] %v327
    %332 = vst [vmem:[%s3 + $0x18] sm:$0x1f] %v328
    // Predicated region
    $region18: #{tpu_custom_call.1} parent=1 // pred_check
      _
    $region19: #{tpu_custom_call.1} parent=1 // pred_check_branch
      %334 = sbr.rel (0) target = $region21
    $region20: #{tpu_custom_call.1} parent=1 // pred_region
      _
    $region21: #{tpu_custom_call.1} parent=1 // pred_fallthru
      _
    // Predicated region
    $region22: #{tpu_custom_call.1} parent=1 // pred_check
      _
    $region23: #{tpu_custom_call.1} parent=1 // pred_check_branch
      %336 = sbr.rel (0) target = $region25
    $region24: #{tpu_custom_call.1} parent=1 // pred_region
      _
    $region25: #{tpu_custom_call.1} parent=1 // pred_fallthru
      _
    %337 = vsyncpa [#allocation3], 1

</llo_original>
